<compile_context>
chip_gen: v7x
topology: tpu7x:2x2x1
jax: 0.10.0
libtpu: 0.0.40
codegen_flags: <defaults>
</compile_context>

<pallas_src>
import jax
import jax.numpy as jnp
from jax import lax
from jax.experimental import pallas as pl
from jax.experimental.pallas import tpu as pltpu


# ----------------------------------------------------------------------------- kernels


def _ca_fused_kernel(x_ref, w1t_ref, w2t_ref, o_ref):
    # x_ref: (TB, C, HW); w1t_ref/w2t_ref: (C, C) pre-transposed; o_ref: (TB, C, HW)
    x = x_ref[...]
    pooled = jnp.max(x, axis=-1).astype(w1t_ref.dtype)            # (TB, C) lane-reduce
    h = lax.dot_general(pooled, w1t_ref[...],
                        dimension_numbers=(((1,), (0,)), ((), ())),
                        preferred_element_type=jnp.float32)       # fc1 on MXU
    h = jnp.maximum(h, 0.0)                                       # ReLU
    z = lax.dot_general(h.astype(w2t_ref.dtype), w2t_ref[...],
                        dimension_numbers=(((1,), (0,)), ((), ())),
                        preferred_element_type=jnp.float32)       # fc2 on MXU
    att = jax.nn.sigmoid(z)                                       # (TB, C) f32
    o_ref[...] = (x * att[:, :, None].astype(x.dtype)).astype(o_ref.dtype)


def _ca_pool_att_kernel(x_ref, w1t_ref, w2t_ref, att_ref):
    # Pass 1 of the spatial-chunked path.
    # x_ref: (1, C, hw_tile); att_ref: (1, C, 1) f32, resident across the HW axis.
    j = pl.program_id(1)

    @pl.when(j == 0)
    def _init():
        att_ref[...] = jnp.full_like(att_ref, -jnp.inf)

    chunk_max = jnp.max(x_ref[...], axis=-1, keepdims=True).astype(jnp.float32)
    att_ref[...] = jnp.maximum(att_ref[...], chunk_max)

    @pl.when(j == pl.num_programs(1) - 1)
    def _finalize():
        pooled = att_ref[...].reshape(1, att_ref.shape[1]).astype(w1t_ref.dtype)
        h = lax.dot_general(pooled, w1t_ref[...],
                            dimension_numbers=(((1,), (0,)), ((), ())),
                            preferred_element_type=jnp.float32)
        h = jnp.maximum(h, 0.0)
        z = lax.dot_general(h.astype(w2t_ref.dtype), w2t_ref[...],
                            dimension_numbers=(((1,), (0,)), ((), ())),
                            preferred_element_type=jnp.float32)
        att_ref[...] = jax.nn.sigmoid(z)[:, :, None]


def _ca_scale_kernel(att_ref, x_ref, o_ref):
    # Pass 2 of the spatial-chunked path: o = x * att (broadcast over HW).
    x = x_ref[...]                                                # (1, C, hw_tile)
    o_ref[...] = (x * att_ref[...].astype(x.dtype)).astype(o_ref.dtype)


# ----------------------------------------------------------------------------- sizing


def _vmem_capacity_bytes():
    try:
        cap = getattr(pltpu.get_tpu_info(), "vmem_capacity_bytes", None)
        if cap:
            return int(cap)
    except Exception:
        pass
    return 64 << 20  # conservative (v7x per-core VMEM)


def _gen_budgets():
    cap = _vmem_capacity_bytes()
    if cap >= (100 << 20):          # v5e / v6e: 128 MiB physical VMEM
        return 12 << 20, 96 << 20   # tile target, scoped-VMEM budget
    return 7 << 20, 44 << 20        # v7x: 64 MiB physical VMEM


def _pick_batch_tile(n, plane_bytes, w_bytes, tile_target, vmem_budget, slack):
    """Largest batch tile TB dividing N s.t. the double-buffered footprint fits the
    generation budget, the tile stays near the per-generation target, and the grid
    keeps >= min(N, 4) steps (>= 2 per v7x TensorCore when the batch allows)."""
    min_grid = min(n, 4)
    tb = 1
    for cand in range(2, n + 1):
        if n % cand:
            continue
        if (n // cand) < min_grid:
            continue
        if cand * plane_bytes > tile_target:
            continue
        if 4 * cand * plane_bytes + w_bytes + slack > vmem_budget:
            continue
        tb = cand
    return tb


# ----------------------------------------------------------------------------- wrapper


def _run_fused(x_flat, w1t, w2t, tile_target, vmem_budget, slack, allow_oversize=False):
    N, C, HW = x_flat.shape
    itemsize = jnp.dtype(x_flat.dtype).itemsize
    w_bytes = 2 * C * C * jnp.dtype(w1t.dtype).itemsize
    plane_bytes = C * HW * itemsize

    tb = 1 if allow_oversize else _pick_batch_tile(
        N, plane_bytes, w_bytes, tile_target, vmem_budget, slack)
    grid = (N // tb,)

    # Never clamp below the true requirement; only raise the scoped limit when the
    # most conservative default (16 MiB on v5e) could be too small.
    vmem_need = 4 * tb * plane_bytes + w_bytes + slack
    vmem_limit = int(vmem_need) if (allow_oversize or vmem_need > (16 << 20)) else None

    cost = pl.CostEstimate(
        flops=N * (3 * C * HW + 4 * C * C),
        transcendentals=N * C,
        bytes_accessed=2 * N * C * HW * itemsize + w_bytes,
    )

    return pl.pallas_call(
        _ca_fused_kernel,
        out_shape=jax.ShapeDtypeStruct((N, C, HW), x_flat.dtype),
        grid_spec=pltpu.PrefetchScalarGridSpec(
            num_scalar_prefetch=0,
            grid=grid,
            in_specs=[
                pl.BlockSpec((tb, C, HW), lambda n: (n, 0, 0)),
                pl.BlockSpec((C, C), lambda n: (0, 0), pipeline_mode=pl.Buffered(1)),
                pl.BlockSpec((C, C), lambda n: (0, 0), pipeline_mode=pl.Buffered(1)),
            ],
            out_specs=pl.BlockSpec((tb, C, HW), lambda n: (n, 0, 0)),
        ),
        compiler_params=pltpu.CompilerParams(
            dimension_semantics=("parallel",),
            vmem_limit_bytes=vmem_limit,
        ),
        cost_estimate=cost,
    )(x_flat, w1t, w2t)


def _run_two_pass(x_flat, w1t, w2t, hw_tile, slack):
    N, C, HW = x_flat.shape
    itemsize = jnp.dtype(x_flat.dtype).itemsize
    w_bytes = 2 * C * C * jnp.dtype(w1t.dtype).itemsize
    n_hw = HW // hw_tile
    chunk_bytes = C * hw_tile * itemsize

    need1 = 2 * chunk_bytes + w_bytes + slack
    need2 = 4 * chunk_bytes + slack
    lim1 = int(need1) if need1 > (16 << 20) else None
    lim2 = int(need2) if need2 > (16 << 20) else None

    # Pass 1: per-channel global max accumulated across the HW grid axis, with
    # fc1 -> ReLU -> fc2 -> sigmoid fused into the final chunk.  Output (N, C, 1) f32.
    att = pl.pallas_call(
        _ca_pool_att_kernel,
        out_shape=jax.ShapeDtypeStruct((N, C, 1), jnp.float32),
        grid_spec=pltpu.PrefetchScalarGridSpec(
            num_scalar_prefetch=0,
            grid=(N, n_hw),
            in_specs=[
                pl.BlockSpec((1, C, hw_tile), lambda n, j: (n, 0, j)),
                pl.BlockSpec((C, C), lambda n, j: (0, 0), pipeline_mode=pl.Buffered(1)),
                pl.BlockSpec((C, C), lambda n, j: (0, 0), pipeline_mode=pl.Buffered(1)),
            ],
            out_specs=pl.BlockSpec((1, C, 1), lambda n, j: (n, 0, 0)),
        ),
        compiler_params=pltpu.CompilerParams(
            dimension_semantics=("parallel", "arbitrary"),
            vmem_limit_bytes=lim1,
        ),
        cost_estimate=pl.CostEstimate(
            flops=N * (C * HW + 4 * C * C),
            transcendentals=N * C,
            bytes_accessed=N * C * HW * itemsize + w_bytes,
        ),
    )(x_flat, w1t, w2t)

    # Pass 2: re-stream x and apply the broadcast per-channel scale.
    return pl.pallas_call(
        _ca_scale_kernel,
        out_shape=jax.ShapeDtypeStruct((N, C, HW), x_flat.dtype),
        grid_spec=pltpu.PrefetchScalarGridSpec(
            num_scalar_prefetch=0,
            grid=(N, n_hw),
            in_specs=[
                pl.BlockSpec((1, C, 1), lambda n, j: (n, 0, 0)),
                pl.BlockSpec((1, C, hw_tile), lambda n, j: (n, 0, j)),
            ],
            out_specs=pl.BlockSpec((1, C, hw_tile), lambda n, j: (n, 0, j)),
        ),
        compiler_params=pltpu.CompilerParams(
            dimension_semantics=("parallel", "parallel"),
            vmem_limit_bytes=lim2,
        ),
        cost_estimate=pl.CostEstimate(
            flops=N * C * HW,
            transcendentals=0,
            bytes_accessed=2 * N * C * HW * itemsize,
        ),
    )(att, x_flat)


def channel_attention(x, w1, w2, *, force_spatial_chunk=False):
    N, C, H, W = x.shape
    HW = H * W
    itemsize = jnp.dtype(x.dtype).itemsize

    # Free reshape (contiguous NCHW) -> lane-dense flattened spatial axis.
    x_flat = x.reshape(N, C, HW)

    # Accept (C, C) or Conv2d-shaped (C, C, 1, 1) weights; pre-transpose once so the
    # kernel dots are (TB, C) @ (C, C) with no in-kernel XLU transpose.
    w1 = w1.reshape(C, C)
    w2 = w2.reshape(C, C)
    w1t, w2t = w1.T, w2.T
    w_bytes = 2 * C * C * jnp.dtype(w1.dtype).itemsize  # single-buffered (Buffered(1))

    tile_target, vmem_budget = _gen_budgets()
    slack = 2 << 20
    plane_bytes = C * HW * itemsize

    plane_fits = 4 * plane_bytes + w_bytes + slack <= vmem_budget
    if plane_fits and not force_spatial_chunk:
        out_flat = _run_fused(x_flat, w1t, w2t, tile_target, vmem_budget, slack)
        return out_flat.reshape(N, C, H, W)

    # Spatial-chunked two-pass fallback: pick the largest HW chunk that is a
    # multiple of 128, divides HW, and fits the generation budget.
    hw_tile = 0
    smallest_ok = 0
    for cand in range(128, HW, 128):
        if HW % cand:
            continue
        chunk = C * cand * itemsize
        if 4 * chunk + w_bytes + slack > vmem_budget:
            continue
        if smallest_ok == 0:
            smallest_ok = cand
        if chunk <= tile_target:
            hw_tile = cand
    if hw_tile == 0:
        hw_tile = smallest_ok

    if hw_tile == 0:
        # TODO(synk): H*W has no VMEM-fitting divisor that is a multiple of 128;
        # run the fused path with an honest (uncapped) scoped-VMEM requirement.
        out_flat = _run_fused(x_flat, w1t, w2t, tile_target, vmem_budget, slack,
                              allow_oversize=True)
    else:
        out_flat = _run_two_pass(x_flat, w1t, w2t, hw_tile, slack)
    return out_flat.reshape(N, C, H, W)


# ----------------------------------------------------------------------------- reference


def channel_attention_ref(x, w1, w2):
    C = x.shape[1]
    w1 = w1.reshape(C, C)
    w2 = w2.reshape(C, C)
    pooled = jnp.max(x, axis=(2, 3))                  # AdaptiveMaxPool2d(1)
    h = jnp.maximum(pooled @ w1.T, 0.0)               # fc1 + ReLU
    att = jax.nn.sigmoid(h @ w2.T)                    # fc2 + sigmoid
    return x * att[:, :, None, None]


if __name__ == "__main__":
    N, C, H, W = 2, 4, 16, 16
    key = jax.random.PRNGKey(0)
    kx, k1, k2 = jax.random.split(key, 3)

    x = jax.random.normal(kx, (N, C, H, W), dtype=jnp.float32)
    # Conv2d(C, C, 1, bias=False) weights, kept squeezed to (C, C).
    bound = 1.0 / (C ** 0.5)
    w1 = jax.random.uniform(k1, (C, C), jnp.float32, -bound, bound)
    w2 = jax.random.uniform(k2, (C, C), jnp.float32, -bound, bound)

    ref = channel_attention_ref(x, w1, w2)

    # Main fused path (single pass over x).
    out = jax.block_until_ready(channel_attention(x, w1, w2))
    assert out.shape == (N, C, H, W)
    assert jnp.allclose(out, ref, atol=1e-5, rtol=1e-5), "fused path mismatch vs reference"

    # Exercise the spatial-chunked two-pass fallback (used when a full (C, H*W)
    # plane would not fit VMEM, e.g. large feature maps on v7x).
    out_fb = jax.block_until_ready(channel_attention(x, w1, w2, force_spatial_chunk=True))
    assert jnp.allclose(out_fb, ref, atol=1e-5, rtol=1e-5), "two-pass path mismatch vs reference"

    print("KERNEL_OK")
</pallas_src>

<mosaic_0001>
module attributes {stable_mosaic.version = 11 : i64} {
  func.func @_ca_fused_kernel(%arg0: i32, %arg1: memref<1x4x256xf32, #tpu.memory_space<vmem>>, %arg2: memref<4x4xf32, #tpu.memory_space<vmem>>, %arg3: memref<4x4xf32, #tpu.memory_space<vmem>>, %arg4: memref<1x4x256xf32, #tpu.memory_space<vmem>>) attributes {dimension_semantics = [#tpu.dimension_semantics<parallel>], iteration_bounds = array<i64: 2>, scalar_prefetch = 0 : i64, scratch_operands = 0 : i64, tpu.core_type = #tpu.core_type<tc>, window_params = [{transform_indices = @transform_0, window_bounds = array<i64: 1, 4, 256>}, {pipeline_mode = #tpu.pipeline_mode<synchronous>, transform_indices = @transform_1, window_bounds = array<i64: 4, 4>}, {pipeline_mode = #tpu.pipeline_mode<synchronous>, transform_indices = @transform_2, window_bounds = array<i64: 4, 4>}, {transform_indices = @transform_3, window_bounds = array<i64: 1, 4, 256>}]} {
    %c0 = arith.constant 0 : index
    %c0_0 = arith.constant 0 : index
    %c0_1 = arith.constant 0 : index
    %0 = vector.load %arg1[%c0, %c0_0, %c0_1] : memref<1x4x256xf32, #tpu.memory_space<vmem>>, vector<1x4x256xf32>
    %cst = arith.constant dense<0xFF800000> : vector<1x4xf32>
    %1 = vector.multi_reduction <maximumf>, %0, %cst [2] : vector<1x4x256xf32> to vector<1x4xf32>
    %c0_2 = arith.constant 0 : index
    %c0_3 = arith.constant 0 : index
    %2 = vector.load %arg2[%c0_2, %c0_3] : memref<4x4xf32, #tpu.memory_space<vmem>>, vector<4x4xf32>
    %cst_4 = arith.constant dense<0.000000e+00> : vector<1x4xf32>
    %3 = tpu.matmul %1, %2, %cst_4 {dimension_numbers = #tpu.dot_dimension_numbers<[1], [0], [0], [1], [0, 0, 1, 1], [], []>} : vector<1x4xf32>, vector<4x4xf32>, vector<1x4xf32> -> vector<1x4xf32>
    %cst_5 = arith.constant 0.000000e+00 : f32
    %4 = vector.broadcast %cst_5 : f32 to vector<1x4xf32>
    %5 = arith.maximumf %3, %4 : vector<1x4xf32>
    %c0_6 = arith.constant 0 : index
    %c0_7 = arith.constant 0 : index
    %6 = vector.load %arg3[%c0_6, %c0_7] : memref<4x4xf32, #tpu.memory_space<vmem>>, vector<4x4xf32>
    %cst_8 = arith.constant dense<0.000000e+00> : vector<1x4xf32>
    %7 = tpu.matmul %5, %6, %cst_8 {dimension_numbers = #tpu.dot_dimension_numbers<[1], [0], [0], [1], [0, 0, 1, 1], [], []>} : vector<1x4xf32>, vector<4x4xf32>, vector<1x4xf32> -> vector<1x4xf32>
    %8 = arith.negf %7 : vector<1x4xf32>
    %9 = math.exp %8 : vector<1x4xf32>
    %cst_9 = arith.constant 1.000000e+00 : f32
    %10 = vector.broadcast %cst_9 : f32 to vector<1x4xf32>
    %11 = arith.addf %10, %9 : vector<1x4xf32>
    %12 = arith.divf %10, %11 : vector<1x4xf32>
    %13 = vector.shape_cast %12 : vector<1x4xf32> to vector<1x4x1xf32>
    %14 = vector.broadcast %13 : vector<1x4x1xf32> to vector<1x4x256xf32>
    %15 = arith.mulf %0, %14 : vector<1x4x256xf32>
    %c0_10 = arith.constant 0 : index
    %c0_11 = arith.constant 0 : index
    %c0_12 = arith.constant 0 : index
    %16 = vector.load %arg4[%c0_10, %c0_11, %c0_12] : memref<1x4x256xf32, #tpu.memory_space<vmem>>, vector<1x4x256xf32>
    tpu.vector_store %arg4[%c0_10, %c0_11, %c0_12], %15 {strides = array<i32>} : memref<1x4x256xf32, #tpu.memory_space<vmem>>, vector<1x4x256xf32>,
    return
  }
  func.func @transform_0(%arg0: i32) -> (i32, i32, i32) {
    %c0_i32 = arith.constant 0 : i32
    %c0_i32_0 = arith.constant 0 : i32
    %c0_i32_1 = arith.constant 0 : i32
    return %arg0, %c0_i32, %c0_i32_0 : i32, i32, i32
  }
  func.func @transform_1(%arg0: i32) -> (i32, i32) {
    %c0_i32 = arith.constant 0 : i32
    %c0_i32_0 = arith.constant 0 : i32
    %c0_i32_1 = arith.constant 0 : i32
    return %c0_i32, %c0_i32_0 : i32, i32
  }
  func.func @transform_2(%arg0: i32) -> (i32, i32) {
    %c0_i32 = arith.constant 0 : i32
    %c0_i32_0 = arith.constant 0 : i32
    %c0_i32_1 = arith.constant 0 : i32
    return %c0_i32, %c0_i32_0 : i32, i32
  }
  func.func @transform_3(%arg0: i32) -> (i32, i32, i32) {
    %c0_i32 = arith.constant 0 : i32
    %c0_i32_0 = arith.constant 0 : i32
    %c0_i32_1 = arith.constant 0 : i32
    return %arg0, %c0_i32, %c0_i32_0 : i32, i32, i32
  }
}

</mosaic_0001>

<llo_original>
// kernel: tpu_custom_call.1
$region0: #{tpu_custom_call.1}
  #allocation0 [shape = 'u32[]', space=smem, size = 0x4, offset = 0x4, fixed_abs, tag = 'smem constant byte address 0x4 - core index']
  #allocation1 [shape = 'u32[144,128]{1,0:T(1,128)}', space=vmem, size = 0x12000, scoped, tag = 'internal scratch']
  %s0 = inlined_call_operand.hbm [shape: f32[2,4,256], index: 0, kind: input, shape index: {}]
  %s1 = inlined_call_operand.hbm [shape: f32[4,4], index: 1, kind: input, shape index: {}]
  %s2 = inlined_call_operand.vmem [shape: f32[4,4], index: 2, kind: input, shape index: {}]
  %s3 = inlined_call_operand.hbm [shape: f32[2,4,256], index: 3, kind: output, shape index: {}]
  %s4 = sld [smem:[#allocation0]]
  $region53: #{tpu_custom_call.1} parent=0
    _
  %s6 = ssub.s32 1, %s4
  %s7 = scalar_select 0, %s6, %s4
  $region1: #{tpu_custom_call.1} parent=0
    #allocation2 [shape = 'u8[8192]{0}', space=vmem, size = 0x2000, scoped, tag = 'input window, operand 0']
    #allocation3 [shape = 's32[2]{0}', space=sflag, size = 0x8, scoped, tag = 'scoped memory for tpu_custom_call.1']
    #allocation4 [shape = 's32[2]{0}', space=sflag, size = 0x8, scoped, tag = 'scoped memory for tpu_custom_call.1']
    #allocation5 [shape = 'u8[2048]{0}', space=vmem, size = 0x800, scoped, tag = 'input window, operand 1, single buffered']
    #allocation6 [shape = 's32[1]{0}', space=sflag, size = 0x4, scoped, tag = 'scoped memory for tpu_custom_call.1']
    #allocation7 [shape = 'u8[8192]{0}', space=vmem, size = 0x2000, scoped, tag = 'output window, operand 0']
    %8 = vsyncpa [#allocation3], 0
    %s9 = scalar_lea.sflag [#allocation3], 1
    %10 = vsyncpa %s9, 0
    %11 = vsyncpa [#allocation6], 0
    %12 = vsyncpa [#allocation4], 0
    %s13 = scalar_lea.sflag [#allocation4], 1
    %14 = vsyncpa %s13, 0
    loop: start=0, step=1, limit=4
    $region2: #{tpu_custom_call.1} parent=1 // loop_pre_header
      _
    $region3: #{tpu_custom_call.1} parent=1 // loop_header
      %s16 = sphi 0, %s20
      %p17 = scmp.ge.s32.totalorder %s16, 4
      %s26 = sphi 0, %s28
      %s29 = sphi 0, %s26
      %s30 = sphi 0, %s29
      %s46 = sphi 0, %s30
      %s50 = sphi 0, %s50
      %s52 = sphi 0, %s50
      %s53 = sphi 0, %s52
      %s67 = sphi 0, %s53
      %s71 = sphi 0, %s71
      %s73 = sphi 0, %s71
      %s74 = sphi 0, %s73
      %s88 = sphi 0, %s74
      %s94 = sphi 0, %s96
      %s97 = sphi 0, %s94
      %s98 = sphi 0, %s97
      %s114 = sphi 0, %s98
    $region4: #{tpu_custom_call.1} parent=1 // loop_header_branch
      %19 = sbr.rel (%p17) target = $region8
    $region5: #{tpu_custom_call.1} parent=1 // loop_body
      %s21 = ssub.s32 %s16, 1
      %s22 = ssub.s32 %s16, 2
      %s23 = sadd.s32 %s16, 1
      %s24 = ssub.s32 %s16, %s23
      %p25 = scmp.eq.s32.totalorder %s24, 0
      %s27 = sadd.s32 %s26, 1
      %s28 = scalar_select %p25, %s26, %s27
      %p31 = pneg %p25
      %p32 = scmp.eq.s32.totalorder %s16, 1
      %p33 = por %p31, %p32
      %p34 = scmp.ne.s32.totalorder %s26, %s29
      %p35 = scmp.eq.s32.totalorder %s16, 0
      %p36 = por %p34, %p35
      %p37 = scmp.ne.s32.totalorder %s26, %s29
      %p38 = scmp.eq.s32.totalorder %s21, 1
      %p39 = por %p37, %p38
      %p40 = scmp.ne.s32.totalorder %s29, %s30
      %p41 = scmp.eq.s32.totalorder %s21, 0
      %p42 = por %p40, %p41
      %p43 = scmp.ne.s32.totalorder %s29, %s30
      %p44 = scmp.eq.s32.totalorder %s22, 1
      %p45 = por %p43, %p44
      %p47 = scmp.ne.s32.totalorder %s30, %s46
      %p48 = scmp.eq.s32.totalorder %s22, 0
      %p49 = por %p47, %p48
      %s51 = sadd.s32 %s50, 1
      %p54 = scmp.eq.s32.totalorder %s16, 1
      %p55 = scmp.ne.s32.totalorder %s50, %s52
      %p56 = scmp.eq.s32.totalorder %s16, 0
      %p57 = por %p55, %p56
      %p58 = scmp.ne.s32.totalorder %s50, %s52
      %p59 = scmp.eq.s32.totalorder %s21, 1
      %p60 = por %p58, %p59
      %p61 = scmp.ne.s32.totalorder %s52, %s53
      %p62 = scmp.eq.s32.totalorder %s21, 0
      %p63 = por %p61, %p62
      %p64 = scmp.ne.s32.totalorder %s52, %s53
      %p65 = scmp.eq.s32.totalorder %s22, 1
      %p66 = por %p64, %p65
      %p68 = scmp.ne.s32.totalorder %s53, %s67
      %p69 = scmp.eq.s32.totalorder %s22, 0
      %p70 = por %p68, %p69
      %s72 = sadd.s32 %s71, 1
      %p75 = scmp.eq.s32.totalorder %s16, 1
      %p76 = scmp.ne.s32.totalorder %s71, %s73
      %p77 = scmp.eq.s32.totalorder %s16, 0
      %p78 = por %p76, %p77
      %p79 = scmp.ne.s32.totalorder %s71, %s73
      %p80 = scmp.eq.s32.totalorder %s21, 1
      %p81 = por %p79, %p80
      %p82 = scmp.ne.s32.totalorder %s73, %s74
      %p83 = scmp.eq.s32.totalorder %s21, 0
      %p84 = por %p82, %p83
      %p85 = scmp.ne.s32.totalorder %s73, %s74
      %p86 = scmp.eq.s32.totalorder %s22, 1
      %p87 = por %p85, %p86
      %p89 = scmp.ne.s32.totalorder %s74, %s88
      %p90 = scmp.eq.s32.totalorder %s22, 0
      %p91 = por %p89, %p90
      %s92 = ssub.s32 %s16, %s23
      %p93 = scmp.eq.s32.totalorder %s92, 0
      %s95 = sadd.s32 %s94, 1
      %s96 = scalar_select %p93, %s94, %s95
      %p99 = pneg %p93
      %p100 = scmp.eq.s32.totalorder %s16, 1
      %p101 = por %p99, %p100
      %p102 = scmp.ne.s32.totalorder %s94, %s97
      %p103 = scmp.eq.s32.totalorder %s16, 0
      %p104 = por %p102, %p103
      %p105 = scmp.ne.s32.totalorder %s94, %s97
      %p106 = scmp.eq.s32.totalorder %s21, 1
      %p107 = por %p105, %p106
      %p108 = scmp.ne.s32.totalorder %s97, %s98
      %p109 = scmp.eq.s32.totalorder %s21, 0
      %p110 = por %p108, %p109
      %p111 = scmp.ne.s32.totalorder %s97, %s98
      %p112 = scmp.eq.s32.totalorder %s22, 1
      %p113 = por %p111, %p112
      %p115 = scmp.ne.s32.totalorder %s98, %s114
      %p116 = scmp.eq.s32.totalorder %s22, 0
      %p117 = por %p115, %p116
      %p118 = scmp.le.s32.totalorder 1, %s16
      %p119 = scmp.lt.s32.totalorder %s16, 3
      %p120 = pnand %p118, %p119
      %p121 = pneg %p120
      // Predicated region
      $region9: #{tpu_custom_call.1} parent=5 // pred_check
        _
      $region10: #{tpu_custom_call.1} parent=5 // pred_check_branch
        %123 = sbr.rel (%p120) target = $region12
      $region11: #{tpu_custom_call.1} parent=5 // pred_region
        %s124 = ssub.s32 %s16, 1
        // Predicated region
        $region13: #{tpu_custom_call.1} parent=11 // pred_check
          %p125 = pneg %p63
        $region14: #{tpu_custom_call.1} parent=11 // pred_check_branch
          %127 = sbr.rel (%p125) target = $region16
        $region15: #{tpu_custom_call.1} parent=11 // pred_region
          %s129 = ssub.s32 64, 64
          %130 = vsyncadd [#allocation6], %s129
          %s132 = sshll.u32 [#allocation5], 4
          %s133 = int_to_ptr.vmem [resolvable:$true] %s132
          %135 = dma.hbm_to_vmem [thread:$0]  %s1, 64, %s133, [#allocation6]
        $region16: #{tpu_custom_call.1} parent=11 // pred_fallthru
          _
        // Predicated region
        $region17: #{tpu_custom_call.1} parent=11 // pred_check
          %p136 = pneg %p84
        $region18: #{tpu_custom_call.1} parent=11 // pred_check_branch
          %138 = sbr.rel (%p136) target = $region20
        $region19: #{tpu_custom_call.1} parent=11 // pred_region
          _
        $region20: #{tpu_custom_call.1} parent=11 // pred_fallthru
          _
      $region12: #{tpu_custom_call.1} parent=5 // pred_fallthru
        _
      %p139 = scmp.lt.s32.totalorder %s16, 2
      // Predicated region
      $region21: #{tpu_custom_call.1} parent=5 // pred_check
        %p140 = pneg %p139
      $region22: #{tpu_custom_call.1} parent=5 // pred_check_branch
        %142 = sbr.rel (%p140) target = $region24
      $region23: #{tpu_custom_call.1} parent=5 // pred_region
        // Predicated region
        $region25: #{tpu_custom_call.1} parent=23 // pred_check
          %p143 = pneg %p36
        $region26: #{tpu_custom_call.1} parent=23 // pred_check_branch
          %145 = sbr.rel (%p143) target = $region28
        $region27: #{tpu_custom_call.1} parent=23 // pred_region
          %s146 = sand.u32 %s26, 1
          %s147 = scalar_lea.sflag [#allocation3], %s146
          %s148 = sand.u32 %s26, 1
          %s149 = smul.addr %s148, 8
          %s150 = scalar_lea.vmem [#allocation2], %s149
          %s152 = ssub.s32 128, 128
          %153 = vsyncadd %s147, %s152
          %s154 = smul.addr %s16, 2
          %s155 = smul.addr %s154, 64
          %s156 = scalar_lea.hbm %s0, %s155
          %s158 = sshll.u32 %s150, 4
          %s159 = int_to_ptr.vmem [resolvable:$true] %s158
          %161 = dma.hbm_to_vmem [thread:$0]  %s156, 128, %s159, %s147
        $region28: #{tpu_custom_call.1} parent=23 // pred_fallthru
          _
      $region24: #{tpu_custom_call.1} parent=5 // pred_fallthru
        _
      %p162 = scmp.le.s32.totalorder 1, %s16
      %p163 = scmp.lt.s32.totalorder %s16, 3
      %p164 = pnand %p162, %p163
      %p165 = pneg %p164
      // Predicated region
      $region29: #{tpu_custom_call.1} parent=5 // pred_check
        _
      $region30: #{tpu_custom_call.1} parent=5 // pred_check_branch
        %167 = sbr.rel (%p164) target = $region32
      $region31: #{tpu_custom_call.1} parent=5 // pred_region
        %s168 = ssub.s32 %s16, 1
        %s169 = sand.u32 %s29, 1
        %s170 = scalar_lea.sflag [#allocation3], %s169
        %s171 = sand.u32 %s29, 1
        %s172 = smul.addr %s171, 8
        %s173 = scalar_lea.vmem [#allocation2], %s172
        // Predicated region
        $region33: #{tpu_custom_call.1} parent=31 // pred_check
          %p174 = pneg %p42
        $region34: #{tpu_custom_call.1} parent=31 // pred_check_branch
          %176 = sbr.rel (%p174) target = $region36
        $region35: #{tpu_custom_call.1} parent=31 // pred_region
          %177 = dma.done %s170, 128
        $region36: #{tpu_custom_call.1} parent=31 // pred_fallthru
          _
        // Predicated region
        $region37: #{tpu_custom_call.1} parent=31 // pred_check
          %p178 = pneg %p63
        $region38: #{tpu_custom_call.1} parent=31 // pred_check_branch
          %180 = sbr.rel (%p178) target = $region40
        $region39: #{tpu_custom_call.1} parent=31 // pred_region
          %181 = dma.done [#allocation6], 64
        $region40: #{tpu_custom_call.1} parent=31 // pred_fallthru
          _
        %s182 = sand.u32 %s29, 1
        %s183 = scalar_lea.sflag [#allocation3], %s182
        %s184 = sand.u32 %s29, 1
        %s185 = smul.addr %s184, 8
        %s186 = scalar_lea.vmem [#allocation2], %s185
        %p187 = pneg %p42
        %p188 = pneg %p39
        %p189 = pneg %p63
        %p190 = pneg %p60
        %p191 = pneg %p84
        %p192 = pneg %p81
        %p193 = pneg %p110
        %p194 = pneg %p107
        %s195 = sand.u32 %s97, 1
        %s196 = scalar_lea.sflag [#allocation4], %s195
        %s197 = sand.u32 %s97, 1
        %s198 = smul.addr %s197, 8
        %s199 = scalar_lea.vmem [#allocation7], %s198
        %v200 = vld [vmem:[%s173] sm:$0xff]
        %v202 = vcombine.high %v200, %v200
        %vm204 = vcmask 1043456
        %v205 = vsel %vm204, %v200, -inf
        %v206 = vsel %vm204, %v202, -inf
        %v207 = vmax.f32 %v205, %v206
        %208 = vmax.xlane.f32.xlu0 %v207
        %v209 = vpop.xlane.xlu0 %208
        %v210 = vld [vmem:[#allocation5] sm:$0xf]
        %v212 = vlaneseq
        %v213 = vand.u32 %v212, 127
        %v214 = vlaneseq
        %v215 = vshrl.u32 %v214, 7
        %v216 = vsub.s32 %v213, %v215
        %v217 = vrot.slane %v209, %v216
        %vm218 = vcmask 31744
        %v219 = vsel %vm218, %v217, 0
        %v222 = vsel %vm204, %v210, 0
        %224 = vmatprep.subr.mxu0 0.0
        %225 = vmatpush1.msra.mxu0 %v222
        %226 = vmatprep.subr.mxu0 0.0
        %227 = vmatpush1.msra.mxu0 0.0
        %228 = vmatprep.subr.mxu0 0.0
        %229 = vmatpush1.msra.mxu0 0.0
        %230 = vmatprep.subr.mxu0 0.0
        %231 = vmatpush1.msra.mxu0 0.0
        %232 = vmatprep.subr.mxu0 0.0
        %233 = vmatpush1.msra.mxu0 0.0
        %234 = vmatprep.subr.mxu0 0.0
        %235 = vmatpush1.msra.mxu0 0.0
        %236 = vmatprep.subr.mxu0 0.0
        %237 = vmatpush1.msra.mxu0 0.0
        %238 = vmatprep.subr.mxu0 0.0
        %239 = vmatpush1.msra.mxu0 0.0
        %240 = vmatprep.subr.mxu0 0.0
        %241 = vmatpush1.msra.mxu0 0.0
        %242 = vmatprep.subr.mxu0 0.0
        %243 = vmatpush1.msra.mxu0 0.0
        %244 = vmatprep.subr.mxu0 0.0
        %245 = vmatpush1.msra.mxu0 0.0
        %246 = vmatprep.subr.mxu0 0.0
        %247 = vmatpush1.msra.mxu0 0.0
        %248 = vmatprep.subr.mxu0 0.0
        %249 = vmatpush1.msra.mxu0 0.0
        %250 = vmatprep.subr.mxu0 0.0
        %251 = vmatpush1.msra.mxu0 0.0
        %252 = vmatprep.subr.mxu0 0.0
        %253 = vmatpush1.msra.mxu0 0.0
        %254 = vmatprep.subr.mxu0 0.0
        %255 = vmatpush1.msra.mxu0 0.0
        %256 = vmatprep.subr.mxu0 0.0
        %257 = vmatpush1.msra.mxu0 0.0
        %258 = vmatprep.subr.mxu0 0.0
        %259 = vmatpush1.msra.mxu0 0.0
        %260 = vmatprep.subr.mxu0 0.0
        %261 = vmatpush1.msra.mxu0 0.0
        %262 = vmatprep.subr.mxu0 0.0
        %263 = vmatpush1.msra.mxu0 0.0
        %264 = vmatprep.subr.mxu0 0.0
        %265 = vmatpush1.msra.mxu0 0.0
        %266 = vmatprep.subr.mxu0 0.0
        %267 = vmatpush1.msra.mxu0 0.0
        %268 = vmatprep.subr.mxu0 0.0
        %269 = vmatpush1.msra.mxu0 0.0
        %270 = vmatprep.subr.mxu0 0.0
        %271 = vmatpush1.msra.mxu0 0.0
        %272 = vmatprep.subr.mxu0 0.0
        %273 = vmatpush1.msra.mxu0 0.0
        %274 = vmatprep.subr.mxu0 0.0
        %275 = vmatpush1.msra.mxu0 0.0
        %276 = vmatprep.subr.mxu0 0.0
        %277 = vmatpush1.msra.mxu0 0.0
        %278 = vmatprep.subr.mxu0 0.0
        %279 = vmatpush1.msra.mxu0 0.0
        %280 = vmatprep.subr.mxu0 0.0
        %281 = vmatpush1.msra.mxu0 0.0
        %282 = vmatprep.subr.mxu0 0.0
        %283 = vmatpush1.msra.mxu0 0.0
        %284 = vmatprep.subr.mxu0 0.0
        %285 = vmatpush1.msra.mxu0 0.0
        %286 = vmatprep.subr.mxu0 0.0
        %287 = vmatpush1.msra.mxu0 0.0
        %288 = vmatprep.mubr.f32.mxu0 0.0
        %289 = vmatmul.mubr.f32.gmra.mrb[0].mxu0 %v219
        %v290 = vpop.f32.mrb[0].mxu0
        %v291 = vadd.f32 0.0, %v290
        %v292 = vpop.f32.mrb[0].mxu0
        %293 = vdwg.mxu0
        %v294 = vmax.f32 %v291, 0.0
        %v295 = vld [vmem:[%s2] sm:$0xf]
        %v297 = vsel %vm218, %v294, 0
        %v300 = vsel %vm204, %v295, 0
        %302 = vmatprep.subr.mxu0 0.0
        %303 = vmatpush1.msra.mxu0 %v300
        %304 = vmatprep.subr.mxu0 0.0
        %305 = vmatpush1.msra.mxu0 0.0
        %306 = vmatprep.subr.mxu0 0.0
        %307 = vmatpush1.msra.mxu0 0.0
        %308 = vmatprep.subr.mxu0 0.0
        %309 = vmatpush1.msra.mxu0 0.0
        %310 = vmatprep.subr.mxu0 0.0
        %311 = vmatpush1.msra.mxu0 0.0
        %312 = vmatprep.subr.mxu0 0.0
        %313 = vmatpush1.msra.mxu0 0.0
        %314 = vmatprep.subr.mxu0 0.0
        %315 = vmatpush1.msra.mxu0 0.0
        %316 = vmatprep.subr.mxu0 0.0
        %317 = vmatpush1.msra.mxu0 0.0
        %318 = vmatprep.subr.mxu0 0.0
        %319 = vmatpush1.msra.mxu0 0.0
        %320 = vmatprep.subr.mxu0 0.0
        %321 = vmatpush1.msra.mxu0 0.0
        %322 = vmatprep.subr.mxu0 0.0
        %323 = vmatpush1.msra.mxu0 0.0
        %324 = vmatprep.subr.mxu0 0.0
        %325 = vmatpush1.msra.mxu0 0.0
        %326 = vmatprep.subr.mxu0 0.0
        %327 = vmatpush1.msra.mxu0 0.0
        %328 = vmatprep.subr.mxu0 0.0
        %329 = vmatpush1.msra.mxu0 0.0
        %330 = vmatprep.subr.mxu0 0.0
        %331 = vmatpush1.msra.mxu0 0.0
        %332 = vmatprep.subr.mxu0 0.0
        %333 = vmatpush1.msra.mxu0 0.0
        %334 = vmatprep.subr.mxu0 0.0
        %335 = vmatpush1.msra.mxu0 0.0
        %336 = vmatprep.subr.mxu0 0.0
        %337 = vmatpush1.msra.mxu0 0.0
        %338 = vmatprep.subr.mxu0 0.0
        %339 = vmatpush1.msra.mxu0 0.0
        %340 = vmatprep.subr.mxu0 0.0
        %341 = vmatpush1.msra.mxu0 0.0
        %342 = vmatprep.subr.mxu0 0.0
        %343 = vmatpush1.msra.mxu0 0.0
        %344 = vmatprep.subr.mxu0 0.0
        %345 = vmatpush1.msra.mxu0 0.0
        %346 = vmatprep.subr.mxu0 0.0
        %347 = vmatpush1.msra.mxu0 0.0
        %348 = vmatprep.subr.mxu0 0.0
        %349 = vmatpush1.msra.mxu0 0.0
        %350 = vmatprep.subr.mxu0 0.0
        %351 = vmatpush1.msra.mxu0 0.0
        %352 = vmatprep.subr.mxu0 0.0
        %353 = vmatpush1.msra.mxu0 0.0
        %354 = vmatprep.subr.mxu0 0.0
        %355 = vmatpush1.msra.mxu0 0.0
        %356 = vmatprep.subr.mxu0 0.0
        %357 = vmatpush1.msra.mxu0 0.0
        %358 = vmatprep.subr.mxu0 0.0
        %359 = vmatpush1.msra.mxu0 0.0
        %360 = vmatprep.subr.mxu0 0.0
        %361 = vmatpush1.msra.mxu0 0.0
        %362 = vmatprep.subr.mxu0 0.0
        %363 = vmatpush1.msra.mxu0 0.0
        %364 = vmatprep.subr.mxu0 0.0
        %365 = vmatpush1.msra.mxu0 0.0
        %366 = vmatprep.mubr.f32.mxu0 0.0
        %367 = vmatmul.mubr.f32.gmra.mrb[0].mxu0 %v297
        %v368 = vpop.f32.mrb[0].mxu0
        %v369 = vadd.f32 0.0, %v368
        %v370 = vpop.f32.mrb[0].mxu0
        %371 = vdwg.mxu0
        %v372 = vxor.u32 %v369, 2147483648
        %v373 = vmul.f32 %v372, 1.442695
        %v374 = vpow.pop %v373
        %v375 = vadd.f32 %v374, 1.0
        %v376 = vrcp.pop %v375
        %v377 = vmul.f32 1.0, %v376
        %v378 = vlaneseq
        %v379 = vshrl.u32 %v378, 7
        %v380 = vsub.s32 0, %v379
        %v381 = vrot.slane %v377, %v380
        %383 = vbcast.lane.b32.xlu0 %v381, 256
        %v384 = vpop.permute.xlu0 %383
        %v387 = vunpack.c.l.s4 839922192
        %v388 = vunpack.c.0.s8 %v387
        %v389 = vlaneseq
        %v390 = vshrl.u32 %v389, 7
        %v391 = vsub.s32 %v388, %v390
        %v392 = vrot.slane %v384, %v391
        %v394 = vmul.f32 %v200, %v392
        %395 = vst [vmem:[%s199] sm:$0xff] %v394
        %s396 = sand.u32 %s97, 1
        %s397 = scalar_lea.sflag [#allocation4], %s396
        %s398 = sand.u32 %s97, 1
        %s399 = smul.addr %s398, 8
        %s400 = scalar_lea.vmem [#allocation7], %s399
        // Predicated region
        $region41: #{tpu_custom_call.1} parent=31 // pred_check
          %p401 = pneg %p107
        $region42: #{tpu_custom_call.1} parent=31 // pred_check_branch
          %403 = sbr.rel (%p401) target = $region44
        $region43: #{tpu_custom_call.1} parent=31 // pred_region
          %s405 = ssub.s32 128, 128
          %406 = vsyncadd %s397, %s405
          %s407 = smul.addr %s21, 2
          %s408 = smul.addr %s407, 64
          %s409 = scalar_lea.hbm %s3, %s408
          %s411 = sshll.u32 %s400, 4
          %s412 = int_to_ptr.vmem [resolvable:$true] %s411
          %414 = dma.vmem_to_hbm [thread:$0]  %s412, 128, %s409, %s397
        $region44: #{tpu_custom_call.1} parent=31 // pred_fallthru
          _
      $region32: #{tpu_custom_call.1} parent=5 // pred_fallthru
        _
      %p415 = scmp.le.s32.totalorder 2, %s16
      // Predicated region
      $region45: #{tpu_custom_call.1} parent=5 // pred_check
        %p416 = pneg %p415
      $region46: #{tpu_custom_call.1} parent=5 // pred_check_branch
        %418 = sbr.rel (%p416) target = $region48
      $region47: #{tpu_custom_call.1} parent=5 // pred_region
        %s419 = ssub.s32 %s16, 2
        // Predicated region
        $region49: #{tpu_custom_call.1} parent=47 // pred_check
          %p420 = pneg %p113
        $region50: #{tpu_custom_call.1} parent=47 // pred_check_branch
          %422 = sbr.rel (%p420) target = $region52
        $region51: #{tpu_custom_call.1} parent=47 // pred_region
          %s423 = sand.u32 %s98, 1
          %s424 = scalar_lea.sflag [#allocation4], %s423
          %s425 = sand.u32 %s98, 1
          %s426 = smul.addr %s425, 8
          %s427 = scalar_lea.vmem [#allocation7], %s426
          %428 = dma.done %s424, 128
        $region52: #{tpu_custom_call.1} parent=47 // pred_fallthru
          _
      $region48: #{tpu_custom_call.1} parent=5 // pred_fallthru
        _
    $region6: #{tpu_custom_call.1} parent=1 // loop_footer
      %s20 = sadd.s32 1, %s16
    $region7: #{tpu_custom_call.1} parent=1 // loop_footer_branch
      %15 = sbr.rel target = $region3
    $region8: #{tpu_custom_call.1} parent=1 // loop_exit
      _
    %429 = vsyncpa [#allocation3], 1
    %s430 = scalar_lea.sflag [#allocation3], 1
    %431 = vsyncpa %s430, 1
    %432 = vsyncpa [#allocation6], 1
    %433 = vsyncpa [#allocation4], 1
    %s434 = scalar_lea.sflag [#allocation4], 1
    %435 = vsyncpa %s434, 1

</llo_original>
